<compile_context>
chip_gen: v7x
topology: tpu7x:2x2x1
jax: 0.10.0
libtpu: 0.0.40
codegen_flags: <defaults>
</compile_context>

<pallas_src>
import functools

import jax
import jax.numpy as jnp
from jax.experimental import pallas as pl
from jax.experimental.pallas import tpu as pltpu


# ----------------------------- helpers ---------------------------------------
def _round_up(x, m):
    return ((x + m - 1) // m) * m


def _pick_tile(n, target, unit):
    """Largest divisor of n that is <= target and a multiple of `unit`.
    Falls back to the full extent (always a legal block shape)."""
    if n <= target or n % unit != 0:
        # TODO(synk): for large N not divisible by `unit`, pad N instead of
        # using a single whole-extent block.
        return n
    t = (min(target, n) // unit) * unit
    while t >= unit:
        if n % t == 0:
            return t
        t -= unit
    return n


def _device_params():
    """Per-generation tiling / VMEM / exp-dtype choices."""
    try:
        kind = jax.devices()[0].device_kind.lower()
    except Exception:
        kind = ""
    if "v7" in kind or "7x" in kind:
        # 64 MiB VMEM per TC, 2 TCs -> small row tiles, explicit vmem limit.
        return dict(tile_n=128, tile_k=512, vmem=48 * 1024 * 1024,
                    exp_dtype=jnp.bfloat16)
    if "v6" in kind:
        return dict(tile_n=512, tile_k=512, vmem=96 * 1024 * 1024,
                    exp_dtype=jnp.bfloat16)
    if "v5" in kind:
        # v5e EUP has no bf16 -> keep exp in f32; MXU still takes bf16 inputs.
        return dict(tile_n=256, tile_k=512, vmem=64 * 1024 * 1024,
                    exp_dtype=jnp.float32)
    return dict(tile_n=256, tile_k=512, vmem=None, exp_dtype=jnp.float32)


# ------------------- kernel A: wtan + node embeddings (once) -----------------
def feature_kernel(x_ref, theta_ref, w1_ref, a_ref, gamma_ref,
                   xout_ref, h_ref, s_ref):
    # wtan: x_out = gamma * tanh(theta * x)      (gamma scalar lives in SMEM)
    gamma = gamma_ref[0, 0]
    xw = gamma * jnp.tanh(x_ref[...] * theta_ref[...])            # (TA, F) f32
    xout_ref[...] = xw
    # glm node embedding: h = xw @ W1   (bf16 MXU inputs, f32 accumulate)
    h = jnp.dot(xw.astype(w1_ref.dtype), w1_ref[...],
                preferred_element_type=jnp.float32)                # (TA, Hp)
    h_ref[...] = h.astype(h_ref.dtype)                             # bf16 store
    # per-node attention scores [a_src . h_i | a_dst . h_i]
    s_ref[...] = jnp.dot(h, a_ref[...], preferred_element_type=jnp.float32)


# -------- kernel B: exact row-softmax stats (running max / sum), col-tiled ----
def softmax_stats_kernel(ssrc_ref, sdst_ref, adj_ref, m_ref, l_ref,
                         m_sc, l_sc, *, exp_dtype):
    k = pl.program_id(1)

    @pl.when(k == 0)
    def _():
        m_sc[...] = jnp.full_like(m_sc, -1e9)   # == mask value; avoids inf-inf
        l_sc[...] = jnp.zeros_like(l_sc)

    # rank-1 GAT scores: e_ij = LeakyReLU(a_src.h_i + a_dst.h_j), no matmul.
    e = ssrc_ref[...] + sdst_ref[...]                              # (TN, TK)
    e = jnp.where(e > 0, e, 0.2 * e)                               # LeakyReLU(0.2)
    e = jnp.where(adj_ref[...] != 0, e, jnp.float32(-1e9))         # mask non-edges

    m_prev = m_sc[...]
    m_new = jnp.maximum(m_prev, jnp.max(e, axis=-1, keepdims=True))
    p = jnp.exp((e - m_new).astype(exp_dtype)).astype(jnp.float32)
    l_sc[...] = l_sc[...] * jnp.exp(m_prev - m_new) + jnp.sum(p, -1, keepdims=True)
    m_sc[...] = m_new

    @pl.when(k == pl.num_programs(1) - 1)
    def _():
        m_ref[...] = m_sc[...]
        l_ref[...] = l_sc[...]


# -------- kernel C: attention emit + aggregate + merged projection -----------
def attend_kernel(ssrc_ref, sdst_ref, adj_ref, m_ref, linv_ref, h_ref, wout_ref,
                  att_ref, rp_ref, acc_sc, *, exp_dtype):
    k = pl.program_id(1)

    @pl.when(k == 0)
    def _():
        acc_sc[...] = jnp.zeros_like(acc_sc)

    e = ssrc_ref[...] + sdst_ref[...]
    e = jnp.where(e > 0, e, 0.2 * e)
    e = jnp.where(adj_ref[...] != 0, e, jnp.float32(-1e9))
    p = jnp.exp((e - m_ref[...]).astype(exp_dtype)).astype(jnp.float32)
    att = p * linv_ref[...]                          # exact 1/l from the wrapper
    att_ref[...] = att.astype(att_ref.dtype)

    # agg += att_blk @ h_blk   (bf16 MXU inputs, f32 accumulator in VMEM)
    acc_sc[...] += jnp.dot(att.astype(h_ref.dtype), h_ref[...],
                           preferred_element_type=jnp.float32)     # (TN, Hp)

    @pl.when(k == pl.num_programs(1) - 1)
    def _():
        # merged lane-dense projection [w_rec | w_pred | zero-pad] : (Hp, Fop)
        rp_ref[...] = jnp.dot(acc_sc[...].astype(wout_ref.dtype), wout_ref[...],
                              preferred_element_type=jnp.float32)


# ------------------------------- wrapper --------------------------------------
def combined_forward(x, adj_i8, theta, gamma, w1, a_cat, w_out,
                     *, att_dtype=jnp.float32):
    N, F = x.shape
    Hp = w1.shape[1]
    Fop = w_out.shape[1]

    prm = _device_params()
    tile_n = _pick_tile(N, prm["tile_n"], 8)     # row tile (sublane unit 8)
    tile_k = _pick_tile(N, prm["tile_k"], 128)   # column tile (lane unit 128)
    exp_dtype = prm["exp_dtype"]
    extra = {}
    if prm["vmem"] is not None:
        extra["vmem_limit_bytes"] = prm["vmem"]

    # ---- pass 1: wtan + h = xw@W1 + per-node scores, computed ONCE ----------
    xout, h_full, s = pl.pallas_call(
        feature_kernel,
        out_shape=(
            jax.ShapeDtypeStruct((N, F), jnp.float32),      # x_out (wtan)
            jax.ShapeDtypeStruct((N, Hp), jnp.bfloat16),    # node embeddings
            jax.ShapeDtypeStruct((N, 2), jnp.float32),      # [s_src | s_dst]
        ),
        grid=(N // tile_n,),
        in_specs=[
            pl.BlockSpec((tile_n, F), lambda i: (i, 0)),
            pl.BlockSpec((1, F), lambda i: (0, 0), pipeline_mode=pl.Buffered(1)),
            pl.BlockSpec((F, Hp), lambda i: (0, 0), pipeline_mode=pl.Buffered(1)),
            pl.BlockSpec((Hp, 2), lambda i: (0, 0), pipeline_mode=pl.Buffered(1)),
            pl.BlockSpec(memory_space=pltpu.MemorySpace.SMEM),      # gamma
        ],
        out_specs=(
            pl.BlockSpec((tile_n, F), lambda i: (i, 0)),
            pl.BlockSpec((tile_n, Hp), lambda i: (i, 0)),
            pl.BlockSpec((tile_n, 2), lambda i: (i, 0)),
        ),
        compiler_params=pltpu.CompilerParams(
            dimension_semantics=("parallel",), **extra),
    )(x, theta, w1, a_cat, gamma)

    s_src = s[:, 0:1]                      # (N, 1) query-side scores
    s_dst = s[:, 1].reshape(1, N)          # (1, N) key-side scores

    grid2 = (N // tile_n, N // tile_k)
    dims2 = ("parallel", "arbitrary")

    # ---- pass 2: exact softmax stats over column tiles ----------------------
    m_rows, l_rows = pl.pallas_call(
        functools.partial(softmax_stats_kernel, exp_dtype=exp_dtype),
        out_shape=(jax.ShapeDtypeStruct((N, 1), jnp.float32),
                   jax.ShapeDtypeStruct((N, 1), jnp.float32)),
        grid=grid2,
        in_specs=[
            pl.BlockSpec((tile_n, 1), lambda i, k: (i, 0)),
            pl.BlockSpec((1, tile_k), lambda i, k: (0, k)),
            pl.BlockSpec((tile_n, tile_k), lambda i, k: (i, k)),
        ],
        out_specs=(pl.BlockSpec((tile_n, 1), lambda i, k: (i, 0)),
                   pl.BlockSpec((tile_n, 1), lambda i, k: (i, 0))),
        scratch_shapes=[pltpu.VMEM((tile_n, 1), jnp.float32),
                        pltpu.VMEM((tile_n, 1), jnp.float32)],
        compiler_params=pltpu.CompilerParams(
            dimension_semantics=dims2, **extra),
    )(s_src, s_dst, adj_i8)

    l_inv = 1.0 / l_rows                   # exact normalization (tiny XLA op)

    # ---- pass 3: attention emit + aggregate + merged output projection -------
    att, rp = pl.pallas_call(
        functools.partial(attend_kernel, exp_dtype=exp_dtype),
        out_shape=(jax.ShapeDtypeStruct((N, N), att_dtype),
                   jax.ShapeDtypeStruct((N, Fop), jnp.float32)),
        grid=grid2,
        in_specs=[
            pl.BlockSpec((tile_n, 1), lambda i, k: (i, 0)),
            pl.BlockSpec((1, tile_k), lambda i, k: (0, k)),
            pl.BlockSpec((tile_n, tile_k), lambda i, k: (i, k)),
            pl.BlockSpec((tile_n, 1), lambda i, k: (i, 0)),
            pl.BlockSpec((tile_n, 1), lambda i, k: (i, 0)),
            pl.BlockSpec((tile_k, Hp), lambda i, k: (k, 0)),
            pl.BlockSpec((Hp, Fop), lambda i, k: (0, 0),
                         pipeline_mode=pl.Buffered(1)),
        ],
        out_specs=(pl.BlockSpec((tile_n, tile_k), lambda i, k: (i, k)),
                   pl.BlockSpec((tile_n, Fop), lambda i, k: (i, 0))),
        scratch_shapes=[pltpu.VMEM((tile_n, Hp), jnp.float32)],
        compiler_params=pltpu.CompilerParams(
            dimension_semantics=dims2, **extra),
    )(s_src, s_dst, adj_i8, m_rows, l_inv, h_full, w_out)

    out_recons = rp[:, :F]
    out_pred = rp[:, F:F + 1]
    return xout, out_recons, out_pred, att


# --------------------------- Combined model ----------------------------------
class CombinedModelPallas:
    """Mirrors CombinedModel.forward(x, edge_index) -> 6-tuple."""

    def __init__(self, num_nodes, num_feats, hidden, key,
                 att_dtype=jnp.float32):
        k = jax.random.split(key, 6)
        self.num_nodes = num_nodes
        self.num_feats = num_feats
        self.att_dtype = att_dtype          # set to bf16 to halve att HBM write

        Hp = _round_up(max(hidden, 1), 128)        # lane-dense hidden
        Fop = _round_up(num_feats + 1, 128)        # lane-dense [recons|pred]

        # wtan params
        self.theta = jax.random.normal(k[0], (1, num_feats), jnp.float32) * 0.5
        self.gamma = jnp.ones((1, 1), jnp.float32) * 1.5

        # glm params; zero-padded lanes never change the math.
        w1 = jax.random.normal(k[1], (num_feats, hidden), jnp.float32) * 0.1
        a_src = jax.random.normal(k[2], (hidden, 1), jnp.float32) * 0.1
        a_dst = jax.random.normal(k[3], (hidden, 1), jnp.float32) * 0.1
        w_rec = jax.random.normal(k[4], (hidden, num_feats), jnp.float32) * 0.1
        w_pred = jax.random.normal(k[5], (hidden, 1), jnp.float32) * 0.1

        self.w1 = (jnp.zeros((num_feats, Hp), jnp.float32)
                   .at[:, :hidden].set(w1)).astype(jnp.bfloat16)
        self.a_cat = (jnp.zeros((Hp, 2), jnp.float32)
                      .at[:hidden, 0].set(a_src[:, 0])
                      .at[:hidden, 1].set(a_dst[:, 0]))
        wo = (jnp.zeros((Hp, Fop), jnp.float32)
              .at[:hidden, :num_feats].set(w_rec)
              .at[:hidden, num_feats].set(w_pred[:, 0]))
        self.w_out = wo.astype(jnp.bfloat16)
        # TODO(synk): fp8 weight storage on v7x if the accuracy budget allows.

    def _edge_index_to_adj(self, edge_index):
        # Glue scatter in plain JAX: dense int8 adjacency + self-loops.
        # TODO(synk): cache adj when edge_index is static across calls, or use a
        # scalar-prefetched block-sparse mask (PrefetchScalarGridSpec) to skip
        # fully-masked column tiles for large sparse graphs.
        N = self.num_nodes
        adj = jnp.zeros((N, N), jnp.int8)
        adj = adj.at[edge_index[0], edge_index[1]].set(1)
        adj = adj.at[jnp.arange(N), jnp.arange(N)].set(1)
        return adj

    def forward(self, x, edge_index, mode=''):
        adj = self._edge_index_to_adj(edge_index)
        x_out, out_recons, out_pred, att_weight = combined_forward(
            x, adj, self.theta, self.gamma, self.w1, self.a_cat, self.w_out,
            att_dtype=self.att_dtype)
        # (out_recons, out_pred, att_weight, thetas, x, gamma)
        return (out_recons, out_pred, att_weight, self.theta, x_out, self.gamma)


# ------------------------ pure-JAX reference ---------------------------------
def _reference_forward(x, adj, theta, gamma, w1, a_cat, w_out, num_feats):
    xw = gamma[0, 0] * jnp.tanh(theta * x)
    h = xw @ w1.astype(jnp.float32)
    s = h @ a_cat
    e = s[:, 0:1] + s[:, 1][None, :]
    e = jnp.where(e > 0, e, 0.2 * e)
    e = jnp.where(adj != 0, e, -1e9)
    att = jax.nn.softmax(e, axis=-1)
    agg = att @ h
    rp = agg @ w_out.astype(jnp.float32)
    return xw, rp[:, :num_feats], rp[:, num_feats:num_feats + 1], att


if __name__ == "__main__":
    N, F, H = 8, 32, 16  # nodes, features, glm hidden dim

    key = jax.random.PRNGKey(0)
    kx, kp = jax.random.split(key)
    x = jax.random.normal(kx, (N, F), jnp.float32)

    # Bidirectional ring graph: 2*N edges, edge_index shape [2, E].
    src = jnp.arange(N, dtype=jnp.int32)
    dst = (src + 1) % N
    edge_index = jnp.stack(
        [jnp.concatenate([src, dst]), jnp.concatenate([dst, src])], axis=0)

    model = CombinedModelPallas(N, F, H, kp)
    outs = jax.block_until_ready(model.forward(x, edge_index))

    out_recons, out_pred, att_weight, thetas, x_t, gamma = outs
    assert out_recons.shape == (N, F)
    assert out_pred.shape == (N, 1)
    assert att_weight.shape == (N, N)
    assert x_t.shape == (N, F)

    # Correctness vs. pure-JAX reference (tolerance covers bf16 MXU inputs and
    # optional bf16 exp on v6e/v7x).
    adj = model._edge_index_to_adj(edge_index)
    rxw, rrec, rpred, ratt = _reference_forward(
        x, adj, model.theta, model.gamma, model.w1, model.a_cat, model.w_out, F)
    att_f32 = att_weight.astype(jnp.float32)
    assert jnp.allclose(x_t, rxw, atol=5e-2, rtol=5e-2)
    assert jnp.allclose(out_recons, rrec, atol=5e-2, rtol=5e-2)
    assert jnp.allclose(out_pred, rpred, atol=5e-2, rtol=5e-2)
    assert jnp.allclose(att_f32, ratt, atol=5e-2, rtol=5e-2)
    assert jnp.allclose(att_f32.sum(axis=-1), 1.0, atol=1e-2)

    print("KERNEL_OK")
</pallas_src>

<mosaic_0001>
module attributes {stable_mosaic.version = 11 : i64} {
  func.func @feature_kernel(%arg0: i32, %arg1: memref<8x32xf32, #tpu.memory_space<vmem>>, %arg2: memref<1x32xf32, #tpu.memory_space<vmem>>, %arg3: memref<32x128xbf16, #tpu.memory_space<vmem>>, %arg4: memref<128x2xf32, #tpu.memory_space<vmem>>, %arg5: memref<1x1xf32, #tpu.memory_space<smem>>, %arg6: memref<8x32xf32, #tpu.memory_space<vmem>>, %arg7: memref<8x128xbf16, #tpu.memory_space<vmem>>, %arg8: memref<8x2xf32, #tpu.memory_space<vmem>>) attributes {dimension_semantics = [#tpu.dimension_semantics<parallel>], iteration_bounds = array<i64: 1>, scalar_prefetch = 0 : i64, scratch_operands = 0 : i64, tpu.core_type = #tpu.core_type<tc>, window_params = [{transform_indices = @transform_0, window_bounds = array<i64: 8, 32>}, {pipeline_mode = #tpu.pipeline_mode<synchronous>, transform_indices = @transform_1, window_bounds = array<i64: 1, 32>}, {pipeline_mode = #tpu.pipeline_mode<synchronous>, transform_indices = @transform_2, window_bounds = array<i64: 32, 128>}, {pipeline_mode = #tpu.pipeline_mode<synchronous>, transform_indices = @transform_3, window_bounds = array<i64: 128, 2>}, {transform_indices = @transform_4, window_bounds = array<i64: 1, 1>}, {transform_indices = @transform_5, window_bounds = array<i64: 8, 32>}, {transform_indices = @transform_6, window_bounds = array<i64: 8, 128>}, {transform_indices = @transform_7, window_bounds = array<i64: 8, 2>}]} {
    %c0 = arith.constant 0 : index
    %c0_0 = arith.constant 0 : index
    %0 = memref.load %arg5[%c0, %c0_0] : memref<1x1xf32, #tpu.memory_space<smem>>
    %c0_1 = arith.constant 0 : index
    %c0_2 = arith.constant 0 : index
    %1 = vector.load %arg1[%c0_1, %c0_2] : memref<8x32xf32, #tpu.memory_space<vmem>>, vector<8x32xf32>
    %c0_3 = arith.constant 0 : index
    %c0_4 = arith.constant 0 : index
    %2 = vector.load %arg2[%c0_3, %c0_4] : memref<1x32xf32, #tpu.memory_space<vmem>>, vector<1x32xf32>
    %3 = vector.broadcast %2 : vector<1x32xf32> to vector<8x32xf32>
    %4 = arith.mulf %1, %3 : vector<8x32xf32>
    %5 = math.tanh %4 : vector<8x32xf32>
    %6 = vector.broadcast %0 : f32 to vector<8x32xf32>
    %7 = arith.mulf %6, %5 : vector<8x32xf32>
    %c0_5 = arith.constant 0 : index
    %c0_6 = arith.constant 0 : index
    %8 = vector.load %arg6[%c0_5, %c0_6] : memref<8x32xf32, #tpu.memory_space<vmem>>, vector<8x32xf32>
    tpu.vector_store %arg6[%c0_5, %c0_6], %7 {strides = array<i32>} : memref<8x32xf32, #tpu.memory_space<vmem>>, vector<8x32xf32>,
    %9 = arith.truncf %7 : vector<8x32xf32> to vector<8x32xbf16>
    %c0_7 = arith.constant 0 : index
    %c0_8 = arith.constant 0 : index
    %10 = vector.load %arg3[%c0_7, %c0_8] : memref<32x128xbf16, #tpu.memory_space<vmem>>, vector<32x128xbf16>
    %cst = arith.constant dense<0.000000e+00> : vector<8x128xf32>
    %11 = tpu.matmul %9, %10, %cst {dimension_numbers = #tpu.dot_dimension_numbers<[1], [0], [0], [1], [0, 0, 1, 1], [], []>} : vector<8x32xbf16>, vector<32x128xbf16>, vector<8x128xf32> -> vector<8x128xf32>
    %12 = arith.truncf %11 : vector<8x128xf32> to vector<8x128xbf16>
    %c0_9 = arith.constant 0 : index
    %c0_10 = arith.constant 0 : index
    %13 = vector.load %arg7[%c0_9, %c0_10] : memref<8x128xbf16, #tpu.memory_space<vmem>>, vector<8x128xbf16>
    tpu.vector_store %arg7[%c0_9, %c0_10], %12 {strides = array<i32>} : memref<8x128xbf16, #tpu.memory_space<vmem>>, vector<8x128xbf16>,
    %c0_11 = arith.constant 0 : index
    %c0_12 = arith.constant 0 : index
    %14 = vector.load %arg4[%c0_11, %c0_12] : memref<128x2xf32, #tpu.memory_space<vmem>>, vector<128x2xf32>
    %cst_13 = arith.constant dense<0.000000e+00> : vector<8x2xf32>
    %15 = tpu.matmul %11, %14, %cst_13 {dimension_numbers = #tpu.dot_dimension_numbers<[1], [0], [0], [1], [0, 0, 1, 1], [], []>} : vector<8x128xf32>, vector<128x2xf32>, vector<8x2xf32> -> vector<8x2xf32>
    %c0_14 = arith.constant 0 : index
    %c0_15 = arith.constant 0 : index
    %16 = vector.load %arg8[%c0_14, %c0_15] : memref<8x2xf32, #tpu.memory_space<vmem>>, vector<8x2xf32>
    tpu.vector_store %arg8[%c0_14, %c0_15], %15 {strides = array<i32>} : memref<8x2xf32, #tpu.memory_space<vmem>>, vector<8x2xf32>,
    return
  }
  func.func @transform_0(%arg0: i32) -> (i32, i32) {
    %c0_i32 = arith.constant 0 : i32
    %c0_i32_0 = arith.constant 0 : i32
    return %arg0, %c0_i32 : i32, i32
  }
  func.func @transform_1(%arg0: i32) -> (i32, i32) {
    %c0_i32 = arith.constant 0 : i32
    %c0_i32_0 = arith.constant 0 : i32
    %c0_i32_1 = arith.constant 0 : i32
    return %c0_i32, %c0_i32_0 : i32, i32
  }
  func.func @transform_2(%arg0: i32) -> (i32, i32) {
    %c0_i32 = arith.constant 0 : i32
    %c0_i32_0 = arith.constant 0 : i32
    %c0_i32_1 = arith.constant 0 : i32
    return %c0_i32, %c0_i32_0 : i32, i32
  }
  func.func @transform_3(%arg0: i32) -> (i32, i32) {
    %c0_i32 = arith.constant 0 : i32
    %c0_i32_0 = arith.constant 0 : i32
    %c0_i32_1 = arith.constant 0 : i32
    return %c0_i32, %c0_i32_0 : i32, i32
  }
  func.func @transform_4(%arg0: i32) -> (i32, i32) {
    %c0_i32 = arith.constant 0 : i32
    %c0_i32_0 = arith.constant 0 : i32
    %c0_i32_1 = arith.constant 0 : i32
    return %c0_i32, %c0_i32_0 : i32, i32
  }
  func.func @transform_5(%arg0: i32) -> (i32, i32) {
    %c0_i32 = arith.constant 0 : i32
    %c0_i32_0 = arith.constant 0 : i32
    return %arg0, %c0_i32 : i32, i32
  }
  func.func @transform_6(%arg0: i32) -> (i32, i32) {
    %c0_i32 = arith.constant 0 : i32
    %c0_i32_0 = arith.constant 0 : i32
    return %arg0, %c0_i32 : i32, i32
  }
  func.func @transform_7(%arg0: i32) -> (i32, i32) {
    %c0_i32 = arith.constant 0 : i32
    %c0_i32_0 = arith.constant 0 : i32
    return %arg0, %c0_i32 : i32, i32
  }
}

</mosaic_0001>

<llo_original>
// kernel: tpu_custom_call.1
$region0: #{tpu_custom_call.1}
  #allocation0 [shape = 'u32[]', space=smem, size = 0x4, offset = 0x4, fixed_abs, tag = 'smem constant byte address 0x4 - core index']
  #allocation1 [shape = 'u32[144,128]{1,0:T(1,128)}', space=vmem, size = 0x12000, scoped, tag = 'internal scratch']
  #allocation2 [shape = 'f32[1,1]{1,0:T(1,128)S(6)}', space=smem, size = 0x200, scoped, tag = 'scoped memory for tpu_custom_call.1']
  %s0 = inlined_call_operand.vmem [shape: f32[8,32], index: 0, kind: input, shape index: {}]
  %s1 = inlined_call_operand.vmem [shape: f32[1,32], index: 1, kind: input, shape index: {}]
  %s2 = inlined_call_operand.vmem [shape: bf16[32,128], index: 2, kind: input, shape index: {}]
  %s3 = inlined_call_operand.vmem [shape: f32[128,2], index: 3, kind: input, shape index: {}]
  %s4 = inlined_call_operand.<no memory space> [shape: f32[1,1], index: 4, kind: input, shape index: {}]
  %s5 = inlined_call_operand.hbm [shape: f32[8,32], index: 5, kind: output, shape index: {0}]
  %s6 = inlined_call_operand.hbm [shape: bf16[8,128], index: 6, kind: output, shape index: {1}]
  %s7 = inlined_call_operand.vmem [shape: f32[8,2], index: 7, kind: output, shape index: {2}]
  %8 = xla_tuple %s5, %s6, %s7
  %s9 = sld [smem:[#allocation0]]
  $region46: #{tpu_custom_call.1} parent=0
    _
  %s11 = ssub.s32 1, %s9
  %s12 = scalar_select 0, %s11, %s9
  %13 = sst [smem:[#allocation2]] %s4
  $region1: #{tpu_custom_call.1} parent=0
    #allocation3 [shape = 'u8[4096]{0}', space=vmem, size = 0x1000, scoped, tag = 'output window, operand 0, single buffered']
    #allocation4 [shape = 's32[1]{0}', space=sflag, size = 0x4, scoped, tag = 'scoped memory for tpu_custom_call.1']
    #allocation5 [shape = 'u8[2048]{0}', space=vmem, size = 0x800, scoped, tag = 'output window, operand 1, single buffered']
    #allocation6 [shape = 's32[1]{0}', space=sflag, size = 0x4, scoped, tag = 'scoped memory for tpu_custom_call.1']
    %14 = vsyncpa [#allocation4], 0
    %15 = vsyncpa [#allocation6], 0
    // Predicated region
    $region2: #{tpu_custom_call.1} parent=1 // pred_check
      _
    $region3: #{tpu_custom_call.1} parent=1 // pred_check_branch
      %17 = sbr.rel (0) target = $region5
    $region4: #{tpu_custom_call.1} parent=1 // pred_region
      _
    $region5: #{tpu_custom_call.1} parent=1 // pred_fallthru
      _
    // Predicated region
    $region6: #{tpu_custom_call.1} parent=1 // pred_check
      _
    $region7: #{tpu_custom_call.1} parent=1 // pred_check_branch
      %19 = sbr.rel (0) target = $region9
    $region8: #{tpu_custom_call.1} parent=1 // pred_region
      _
    $region9: #{tpu_custom_call.1} parent=1 // pred_fallthru
      _
    // Predicated region
    $region10: #{tpu_custom_call.1} parent=1 // pred_check
      _
    $region11: #{tpu_custom_call.1} parent=1 // pred_check_branch
      %21 = sbr.rel (0) target = $region13
    $region12: #{tpu_custom_call.1} parent=1 // pred_region
      _
    $region13: #{tpu_custom_call.1} parent=1 // pred_fallthru
      _
    // Predicated region
    $region14: #{tpu_custom_call.1} parent=1 // pred_check
      _
    $region15: #{tpu_custom_call.1} parent=1 // pred_check_branch
      %23 = sbr.rel (0) target = $region17
    $region16: #{tpu_custom_call.1} parent=1 // pred_region
      _
    $region17: #{tpu_custom_call.1} parent=1 // pred_fallthru
      _
    // Predicated region
    $region18: #{tpu_custom_call.1} parent=1 // pred_check
      _
    $region19: #{tpu_custom_call.1} parent=1 // pred_check_branch
      %25 = sbr.rel (0) target = $region21
    $region20: #{tpu_custom_call.1} parent=1 // pred_region
      _
    $region21: #{tpu_custom_call.1} parent=1 // pred_fallthru
      _
    %s27 = sld [smem:[#allocation2]]
    %v28 = vld [vmem:[%s0] sm:$0xff]
    %v29 = vld [vmem:[%s1] sm:$0x1]
    %v31 = vlaneseq
    %v32 = vshrl.u32 %v31, 7
    %v33 = vsub.s32 0, %v32
    %v34 = vrot.slane %v29, %v33
    %v36 = vmul.f32 %v28, %v34
    %v37 = vtanh.pop %v36
    %v38 = vstv %s27
    %v39 = vmul.f32 %v38, %v37
    %vm40 = vcmask 261120
    %41 = vst.msk [vmem:[#allocation3] sm:$0xff] %vm40, %v39
    %v42 = vpack.c.bf16 %v39, %v39
    %v43 = vld [vmem:[%s2] sm:$0xf]
    %v44 = vld [vmem:[%s2 + $0x4] sm:$0xf]
    %v45 = vld [vmem:[%s2 + $0x8] sm:$0xf]
    %v46 = vld [vmem:[%s2 + $0xc] sm:$0xf]
    %v51 = vunpack.c.l.b16 %v43
    %v52 = vunpack.c.l.b16 %v44
    %v53 = vunpack.c.l.b16 %v45
    %v54 = vunpack.c.l.b16 %v46
    %v55 = vpack.c.b16 %v52, %v51
    %v56 = vpack.c.b16 %v54, %v53
    %v60 = vsel %vm40, %v42, 0
    %62 = vmatprep.subr.bf16.mxu0 0
    %63 = vmatpush1.bf16.msra.mxu0 %v55
    %64 = vmatprep.subr.bf16.mxu0 0
    %65 = vmatpush1.bf16.msra.mxu0 %v56
    %66 = vmatprep.subr.bf16.mxu0 0
    %67 = vmatpush1.bf16.msra.mxu0 0
    %68 = vmatprep.subr.bf16.mxu0 0
    %69 = vmatpush1.bf16.msra.mxu0 0
    %70 = vmatprep.subr.bf16.mxu0 0
    %71 = vmatpush1.bf16.msra.mxu0 0
    %72 = vmatprep.subr.bf16.mxu0 0
    %73 = vmatpush1.bf16.msra.mxu0 0
    %74 = vmatprep.subr.bf16.mxu0 0
    %75 = vmatpush1.bf16.msra.mxu0 0
    %76 = vmatprep.subr.bf16.mxu0 0
    %77 = vmatpush1.bf16.msra.mxu0 0
    %78 = vmatprep.subr.bf16.mxu0 0
    %79 = vmatpush1.bf16.msra.mxu0 0
    %80 = vmatprep.subr.bf16.mxu0 0
    %81 = vmatpush1.bf16.msra.mxu0 0
    %82 = vmatprep.subr.bf16.mxu0 0
    %83 = vmatpush1.bf16.msra.mxu0 0
    %84 = vmatprep.subr.bf16.mxu0 0
    %85 = vmatpush1.bf16.msra.mxu0 0
    %86 = vmatprep.subr.bf16.mxu0 0
    %87 = vmatpush1.bf16.msra.mxu0 0
    %88 = vmatprep.subr.bf16.mxu0 0
    %89 = vmatpush1.bf16.msra.mxu0 0
    %90 = vmatprep.subr.bf16.mxu0 0
    %91 = vmatpush1.bf16.msra.mxu0 0
    %92 = vmatprep.subr.bf16.mxu0 0
    %93 = vmatpush1.bf16.msra.mxu0 0
    %94 = vmatprep.mubr.bf16.mxu0 0
    %95 = vmatmul.mubr.bf16.gmra.mrb[0].mxu0 %v60
    %v96 = vpop.f32.mrb[0].mxu0
    %v97 = vadd.f32 0.0, %v96
    %v98 = vpop.f32.mrb[0].mxu0
    %v99 = vpop.f32.mrb[0].mxu0
    %v100 = vpop.f32.mrb[0].mxu0
    %101 = vdwg.mxu0
    %v102 = vpack.c.bf16 %v97, %v97
    %103 = vst [vmem:[#allocation5] sm:$0xf] %v102
    %v104 = vld [vmem:[%s3] sm:$0xff]
    %v105 = vld [vmem:[%s3 + $0x8] sm:$0xff]
    %v106 = vld [vmem:[%s3 + $0x10] sm:$0xff]
    %v107 = vld [vmem:[%s3 + $0x18] sm:$0xff]
    %v108 = vld [vmem:[%s3 + $0x20] sm:$0xff]
    %v109 = vld [vmem:[%s3 + $0x28] sm:$0xff]
    %v110 = vld [vmem:[%s3 + $0x30] sm:$0xff]
    %v111 = vld [vmem:[%s3 + $0x38] sm:$0xff]
    %v112 = vld [vmem:[%s3 + $0x40] sm:$0xff]
    %v113 = vld [vmem:[%s3 + $0x48] sm:$0xff]
    %v114 = vld [vmem:[%s3 + $0x50] sm:$0xff]
    %v115 = vld [vmem:[%s3 + $0x58] sm:$0xff]
    %v116 = vld [vmem:[%s3 + $0x60] sm:$0xff]
    %v117 = vld [vmem:[%s3 + $0x68] sm:$0xff]
    %v118 = vld [vmem:[%s3 + $0x70] sm:$0xff]
    %v119 = vld [vmem:[%s3 + $0x78] sm:$0xff]
    %120 = vmatprep.subr.mxu0 0.0
    %121 = vmatpush1.msra.mxu0 %v104
    %122 = vmatprep.subr.mxu0 0.0
    %123 = vmatpush1.msra.mxu0 %v105
    %124 = vmatprep.subr.mxu0 0.0
    %125 = vmatpush1.msra.mxu0 %v106
    %126 = vmatprep.subr.mxu0 0.0
    %127 = vmatpush1.msra.mxu0 %v107
    %128 = vmatprep.subr.mxu0 0.0
    %129 = vmatpush1.msra.mxu0 %v108
    %130 = vmatprep.subr.mxu0 0.0
    %131 = vmatpush1.msra.mxu0 %v109
    %132 = vmatprep.subr.mxu0 0.0
    %133 = vmatpush1.msra.mxu0 %v110
    %134 = vmatprep.subr.mxu0 0.0
    %135 = vmatpush1.msra.mxu0 %v111
    %136 = vmatprep.subr.mxu0 0.0
    %137 = vmatpush1.msra.mxu0 %v112
    %138 = vmatprep.subr.mxu0 0.0
    %139 = vmatpush1.msra.mxu0 %v113
    %140 = vmatprep.subr.mxu0 0.0
    %141 = vmatpush1.msra.mxu0 %v114
    %142 = vmatprep.subr.mxu0 0.0
    %143 = vmatpush1.msra.mxu0 %v115
    %144 = vmatprep.subr.mxu0 0.0
    %145 = vmatpush1.msra.mxu0 %v116
    %146 = vmatprep.subr.mxu0 0.0
    %147 = vmatpush1.msra.mxu0 %v117
    %148 = vmatprep.subr.mxu0 0.0
    %149 = vmatpush1.msra.mxu0 %v118
    %150 = vmatprep.subr.mxu0 0.0
    %151 = vmatpush1.msra.mxu0 %v119
    %152 = vmatprep.subr.mxu0 0.0
    %153 = vmatpush1.msra.mxu0 0.0
    %154 = vmatprep.subr.mxu0 0.0
    %155 = vmatpush1.msra.mxu0 0.0
    %156 = vmatprep.subr.mxu0 0.0
    %157 = vmatpush1.msra.mxu0 0.0
    %158 = vmatprep.subr.mxu0 0.0
    %159 = vmatpush1.msra.mxu0 0.0
    %160 = vmatprep.subr.mxu0 0.0
    %161 = vmatpush1.msra.mxu0 0.0
    %162 = vmatprep.subr.mxu0 0.0
    %163 = vmatpush1.msra.mxu0 0.0
    %164 = vmatprep.subr.mxu0 0.0
    %165 = vmatpush1.msra.mxu0 0.0
    %166 = vmatprep.subr.mxu0 0.0
    %167 = vmatpush1.msra.mxu0 0.0
    %168 = vmatprep.subr.mxu0 0.0
    %169 = vmatpush1.msra.mxu0 0.0
    %170 = vmatprep.subr.mxu0 0.0
    %171 = vmatpush1.msra.mxu0 0.0
    %172 = vmatprep.subr.mxu0 0.0
    %173 = vmatpush1.msra.mxu0 0.0
    %174 = vmatprep.subr.mxu0 0.0
    %175 = vmatpush1.msra.mxu0 0.0
    %176 = vmatprep.subr.mxu0 0.0
    %177 = vmatpush1.msra.mxu0 0.0
    %178 = vmatprep.subr.mxu0 0.0
    %179 = vmatpush1.msra.mxu0 0.0
    %180 = vmatprep.subr.mxu0 0.0
    %181 = vmatpush1.msra.mxu0 0.0
    %182 = vmatprep.subr.mxu0 0.0
    %183 = vmatpush1.msra.mxu0 0.0
    %184 = vmatprep.mubr.f32.mxu0 0.0
    %185 = vmatmul.mubr.f32.gmra.mrb[0].mxu0 %v97
    %v186 = vpop.f32.mrb[0].mxu0
    %v187 = vadd.f32 0.0, %v186
    %v188 = vpop.f32.mrb[0].mxu0
    %189 = vdwg.mxu0
    %vm190 = vcmask 15360
    %191 = vst.msk [vmem:[%s7] sm:$0xff] %vm190, %v187
    // Predicated region
    $region22: #{tpu_custom_call.1} parent=1 // pred_check
      _
    $region23: #{tpu_custom_call.1} parent=1 // pred_check_branch
      %193 = sbr.rel (0) target = $region25
    $region24: #{tpu_custom_call.1} parent=1 // pred_region
      %s195 = ssub.s32 128, 128
      %196 = vsyncadd [#allocation4], %s195
      %s198 = sshll.u32 [#allocation3], 4
      %s199 = int_to_ptr.vmem [resolvable:$true] %s198
      %201 = dma.vmem_to_hbm [thread:$0]  %s199, 128, %s5, [#allocation4]
    $region25: #{tpu_custom_call.1} parent=1 // pred_fallthru
      _
    // Predicated region
    $region26: #{tpu_custom_call.1} parent=1 // pred_check
      _
    $region27: #{tpu_custom_call.1} parent=1 // pred_check_branch
      %203 = sbr.rel (0) target = $region29
    $region28: #{tpu_custom_call.1} parent=1 // pred_region
      %s205 = ssub.s32 64, 64
      %206 = vsyncadd [#allocation6], %s205
      %s208 = sshll.u32 [#allocation5], 4
      %s209 = int_to_ptr.vmem [resolvable:$true] %s208
      %211 = dma.vmem_to_hbm [thread:$0]  %s209, 64, %s6, [#allocation6]
    $region29: #{tpu_custom_call.1} parent=1 // pred_fallthru
      _
    // Predicated region
    $region30: #{tpu_custom_call.1} parent=1 // pred_check
      _
    $region31: #{tpu_custom_call.1} parent=1 // pred_check_branch
      %213 = sbr.rel (0) target = $region33
    $region32: #{tpu_custom_call.1} parent=1 // pred_region
      _
    $region33: #{tpu_custom_call.1} parent=1 // pred_fallthru
      _
    // Predicated region
    $region34: #{tpu_custom_call.1} parent=1 // pred_check
      _
    $region35: #{tpu_custom_call.1} parent=1 // pred_check_branch
      %215 = sbr.rel (0) target = $region37
    $region36: #{tpu_custom_call.1} parent=1 // pred_region
      %216 = dma.done [#allocation4], 128
    $region37: #{tpu_custom_call.1} parent=1 // pred_fallthru
      _
    // Predicated region
    $region38: #{tpu_custom_call.1} parent=1 // pred_check
      _
    $region39: #{tpu_custom_call.1} parent=1 // pred_check_branch
      %218 = sbr.rel (0) target = $region41
    $region40: #{tpu_custom_call.1} parent=1 // pred_region
      %219 = dma.done [#allocation6], 64
    $region41: #{tpu_custom_call.1} parent=1 // pred_fallthru
      _
    // Predicated region
    $region42: #{tpu_custom_call.1} parent=1 // pred_check
      _
    $region43: #{tpu_custom_call.1} parent=1 // pred_check_branch
      %221 = sbr.rel (0) target = $region45
    $region44: #{tpu_custom_call.1} parent=1 // pred_region
      _
    $region45: #{tpu_custom_call.1} parent=1 // pred_fallthru
      _
    %222 = vsyncpa [#allocation4], 1
    %223 = vsyncpa [#allocation6], 1

</llo_original>
